<compile_context>
chip_gen: v7x
topology: tpu7x:2x2x1
jax: 0.10.0
libtpu: 0.0.40
codegen_flags: <defaults>
</compile_context>

<pallas_src>
import jax
import jax.numpy as jnp
from jax.experimental import pallas as pl
from jax.experimental.pallas import tpu as pltpu


# ----------------------------------------------------------------------------
# Kernel: per-channel image normalization  y = (x - mean_row) * inv_std_row
#         + per-block partial |y| sums (reduced to per-plane means in JAX)
# ----------------------------------------------------------------------------
def _normalize_kernel(mean_ref, inv_ref, x_ref, o_ref, part_ref):
    # mean_ref / inv_ref: (rows, 1) resident VMEM operands (broadcast over lanes).
    x = x_ref[...].astype(jnp.float32)                       # (rows, lane_tile)
    y = (x - mean_ref[...]) * inv_ref[...]                   # 2 VPU ops / elem
    o_ref[...] = y.astype(o_ref.dtype)
    # Per-block partial abs-sum: cross-lane reduce goes to the XLU slot; each grid
    # step writes its own (1, rows, 1) block -> no RMW, grid axis stays PARALLEL.
    part_ref[...] = jnp.sum(jnp.abs(y), axis=-1, keepdims=True).reshape(part_ref.shape)


def _pick_lane_tile(hw, rows, target_bytes=4 << 20):
    """Largest multiple-of-128 divisor of hw with rows*tile*4 ~<= target_bytes."""
    # Cap against the actual chip's VMEM (v7x has 64 MiB physical / 32 MiB scoped,
    # half of v5e/v6e) so a single code path is safe on all generations.
    try:
        vmem_cap = pltpu.get_tpu_info().vmem_capacity_bytes
        target_bytes = min(target_bytes, max(1 << 20, vmem_cap // 16))
    except Exception:
        pass
    if hw % 128 != 0:
        # TODO(synk): pad or Element-tile large non-128-divisible images; a
        # full-extent block is always legal but may exceed scoped VMEM on v7x.
        return hw
    target_lanes = max(128, (target_bytes // (rows * 4)) // 128 * 128)
    best = 128
    t = 128
    limit = min(hw, target_lanes)
    while t <= limit:
        if hw % t == 0:
            best = t
        t += 128
    return best


def normalizer_pallas(imgs, pixel_mean, pixel_std, out_dtype=None):
    """imgs: (N, C, H, W); returns (normalized (N,C,H,W) f32-math, abs_mean (N, C))."""
    N, C, H, W = imgs.shape
    rows = N * C
    HW = H * W
    if out_dtype is None:
        out_dtype = imgs.dtype  # pass jnp.bfloat16 in production for ~2x less HBM write traffic

    # Lane-dense (rows, HW) view: the 128-wide lane axis is fully occupied.
    x2d = imgs.reshape(rows, HW)
    lane_tile = _pick_lane_tile(HW, rows)
    num_tiles = HW // lane_tile

    # Per-row normalization constants (row r of the (N*C, HW) view is channel r % C).
    # Tiny (rows, 1) operands — jit-safe (no trace-time host sync), resident in VMEM.
    mean_col = jnp.broadcast_to(
        jnp.asarray(pixel_mean, jnp.float32).reshape(1, C), (N, C)).reshape(rows, 1)
    inv_col = jnp.broadcast_to(
        1.0 / jnp.asarray(pixel_std, jnp.float32).reshape(1, C), (N, C)).reshape(rows, 1)

    norm2d, partials = pl.pallas_call(
        _normalize_kernel,
        out_shape=(
            jax.ShapeDtypeStruct((rows, HW), out_dtype),
            jax.ShapeDtypeStruct((num_tiles, rows, 1), jnp.float32),
        ),
        grid_spec=pltpu.PrefetchScalarGridSpec(
            num_scalar_prefetch=0,
            grid=(num_tiles,),
            in_specs=[
                pl.BlockSpec((rows, 1), lambda l: (0, 0)),          # mean  (resident)
                pl.BlockSpec((rows, 1), lambda l: (0, 0)),          # 1/std (resident)
                pl.BlockSpec((rows, lane_tile), lambda l: (0, l)),  # image lane-tile
            ],
            out_specs=(
                pl.BlockSpec((rows, lane_tile), lambda l: (0, l)),
                pl.BlockSpec((1, rows, 1), lambda l: (l, 0, 0)),    # per-block partials
            ),
        ),
        compiler_params=pltpu.CompilerParams(
            # no cross-step dependency -> shardable across v7x's two TensorCores
            dimension_semantics=("parallel",),
            vmem_limit_bytes=32 * 1024 * 1024,
        ),
    )(mean_col, inv_col, x2d)

    normalized = norm2d.reshape(N, C, H, W)
    # Finish the tiny cross-tile reduction in plain JAX (num_tiles * rows elements).
    abs_sum_per_plane = jnp.sum(partials[:, :, 0], axis=0)          # (rows,)
    abs_mean_per_plane = (abs_sum_per_plane / float(HW)).reshape(N, C)
    return normalized, abs_mean_per_plane


# ----------------------------------------------------------------------------
# NeuralRecon.forward (the parts expressible from the given code)
# ----------------------------------------------------------------------------
def neural_recon_forward(inputs, pixel_mean, pixel_std, loss_lw):
    imgs = inputs["imgs"]                     # (B, V, C, H, W)  -- NCHW per view
    B, V, C, H, W = imgs.shape

    # torch.unbind(inputs['imgs'], 1): every view of every batch element is
    # normalized identically for both backbone streams -> one fused lane-dense pass.
    # No wrapper-side f32 cast: the kernel casts on load.
    imgs_flat = imgs.reshape(B * V, C, H, W)
    normalized_flat, abs_mean_per_plane = normalizer_pallas(
        imgs_flat, pixel_mean, pixel_std, out_dtype=jnp.float32)
    normalized_imgs = normalized_flat.reshape(B, V, C, H, W)

    # TODO(synk): self.backbone2d / self.backbone_occ_pano (MnasMulti) not provided.
    # The normalized tensor is returned once; per-view slices would be taken lazily
    # by the backbones (materializing V slices twice would ~3x the HBM traffic).

    # Per-view mean(|normalized|), computed from the kernel's fused partial sums
    # (no extra HBM read of the normalized tensor).
    per_view_abs_mean = abs_mean_per_plane.reshape(B, V, C).mean(axis=(0, 2))   # (V,)

    # TODO(synk): self.neucon_net (NeuConNet) not provided; emit deterministic
    # placeholder per-scale losses derived from the fused statistics.
    n_losses = int(loss_lw.shape[0])
    loss_dict = {}
    for i in range(n_losses):
        loss_dict[f"loss_{i}"] = per_view_abs_mean[i % V] * (0.5 + 0.1 * i)

    # TODO(synk): self.fuse_to_global (GRUFusion) not provided (inference-only branch).

    # weighted_loss = sum_i loss_i * cfg.LW[i]  -- 4 elements: plain JAX (XLA fuses it).
    loss_vec = jnp.stack([loss_dict[f"loss_{i}"] for i in range(n_losses)])
    loss_dict["total_loss"] = jnp.sum(loss_vec * loss_lw.astype(jnp.float32))

    outputs = {"normalized_imgs": normalized_imgs}
    return outputs, loss_dict


if __name__ == "__main__":
    key = jax.random.PRNGKey(0)

    # Small, deterministic config / inputs.
    B, V, C, H, W = 2, 3, 3, 16, 16          # batch, views, RGB, 16x16 images
    pixel_mean = jnp.array([103.53, 116.28, 123.675], jnp.float32)   # cfg.MODEL.PIXEL_MEAN
    pixel_std = jnp.array([58.395, 57.12, 57.375], jnp.float32)      # cfg.MODEL.PIXEL_STD
    loss_lw = jnp.array([1.0, 0.8, 0.64, 0.8], jnp.float32)          # cfg.LW

    imgs = jax.random.uniform(key, (B, V, C, H, W), jnp.float32, 0.0, 255.0)
    inputs = {"imgs": imgs}

    forward = jax.jit(neural_recon_forward)
    outputs, loss_dict = forward(inputs, pixel_mean, pixel_std, loss_lw)
    jax.block_until_ready(outputs["normalized_imgs"])
    jax.block_until_ready(loss_dict["total_loss"])

    # Reference check of the Pallas hot path against plain JAX.
    ref_norm = (imgs - pixel_mean.reshape(1, 1, C, 1, 1)) / pixel_std.reshape(1, 1, C, 1, 1)
    assert jnp.allclose(outputs["normalized_imgs"], ref_norm, atol=1e-5, rtol=1e-5)

    # Reference check of the fused abs-mean statistics + weighted loss.
    ref_view_abs = jnp.stack([jnp.mean(jnp.abs(ref_norm[:, v])) for v in range(V)])
    ref_losses = jnp.stack([ref_view_abs[i % V] * (0.5 + 0.1 * i)
                            for i in range(loss_lw.shape[0])])
    ref_total = jnp.sum(ref_losses * loss_lw)
    assert jnp.allclose(loss_dict["total_loss"], ref_total, atol=1e-5, rtol=1e-4)

    print("KERNEL_OK")
</pallas_src>

<mosaic_0001>
module attributes {stable_mosaic.version = 11 : i64} {
  func.func @_normalize_kernel(%arg0: i32, %arg1: memref<18x1xf32, #tpu.memory_space<vmem>>, %arg2: memref<18x1xf32, #tpu.memory_space<vmem>>, %arg3: memref<18x256xf32, #tpu.memory_space<vmem>>, %arg4: memref<18x256xf32, #tpu.memory_space<vmem>>, %arg5: memref<1x18x1xf32, #tpu.memory_space<vmem>>) attributes {dimension_semantics = [#tpu.dimension_semantics<parallel>], iteration_bounds = array<i64: 1>, scalar_prefetch = 0 : i64, scratch_operands = 0 : i64, tpu.core_type = #tpu.core_type<tc>, window_params = [{pipeline_mode = #tpu.pipeline_mode<synchronous>, transform_indices = @transform_0, window_bounds = array<i64: 18, 1>}, {pipeline_mode = #tpu.pipeline_mode<synchronous>, transform_indices = @transform_1, window_bounds = array<i64: 18, 1>}, {transform_indices = @transform_2, window_bounds = array<i64: 18, 256>}, {transform_indices = @transform_3, window_bounds = array<i64: 18, 256>}, {transform_indices = @transform_4, window_bounds = array<i64: 1, 18, 1>}]} {
    %c0 = arith.constant 0 : index
    %c0_0 = arith.constant 0 : index
    %0 = vector.load %arg3[%c0, %c0_0] : memref<18x256xf32, #tpu.memory_space<vmem>>, vector<18x256xf32>
    %c0_1 = arith.constant 0 : index
    %c0_2 = arith.constant 0 : index
    %1 = vector.load %arg1[%c0_1, %c0_2] : memref<18x1xf32, #tpu.memory_space<vmem>>, vector<18x1xf32>
    %2 = vector.broadcast %1 : vector<18x1xf32> to vector<18x256xf32>
    %3 = arith.subf %0, %2 : vector<18x256xf32>
    %c0_3 = arith.constant 0 : index
    %c0_4 = arith.constant 0 : index
    %4 = vector.load %arg2[%c0_3, %c0_4] : memref<18x1xf32, #tpu.memory_space<vmem>>, vector<18x1xf32>
    %5 = vector.broadcast %4 : vector<18x1xf32> to vector<18x256xf32>
    %6 = arith.mulf %3, %5 : vector<18x256xf32>
    %c0_5 = arith.constant 0 : index
    %c0_6 = arith.constant 0 : index
    %7 = vector.load %arg4[%c0_5, %c0_6] : memref<18x256xf32, #tpu.memory_space<vmem>>, vector<18x256xf32>
    tpu.vector_store %arg4[%c0_5, %c0_6], %6 {strides = array<i32>} : memref<18x256xf32, #tpu.memory_space<vmem>>, vector<18x256xf32>,
    %8 = math.absf %6 : vector<18x256xf32>
    %cst = arith.constant dense<0.000000e+00> : vector<18xf32>
    %9 = vector.multi_reduction <add>, %8, %cst [1] : vector<18x256xf32> to vector<18xf32>
    %10 = vector.shape_cast %9 : vector<18xf32> to vector<18x1xf32>
    %11 = vector.shape_cast %10 : vector<18x1xf32> to vector<1x18x1xf32>
    %c0_7 = arith.constant 0 : index
    %c0_8 = arith.constant 0 : index
    %c0_9 = arith.constant 0 : index
    %12 = vector.load %arg5[%c0_7, %c0_8, %c0_9] : memref<1x18x1xf32, #tpu.memory_space<vmem>>, vector<1x18x1xf32>
    tpu.vector_store %arg5[%c0_7, %c0_8, %c0_9], %11 {strides = array<i32>} : memref<1x18x1xf32, #tpu.memory_space<vmem>>, vector<1x18x1xf32>,
    return
  }
  func.func @transform_0(%arg0: i32) -> (i32, i32) {
    %c0_i32 = arith.constant 0 : i32
    %c0_i32_0 = arith.constant 0 : i32
    %c0_i32_1 = arith.constant 0 : i32
    return %c0_i32, %c0_i32_0 : i32, i32
  }
  func.func @transform_1(%arg0: i32) -> (i32, i32) {
    %c0_i32 = arith.constant 0 : i32
    %c0_i32_0 = arith.constant 0 : i32
    %c0_i32_1 = arith.constant 0 : i32
    return %c0_i32, %c0_i32_0 : i32, i32
  }
  func.func @transform_2(%arg0: i32) -> (i32, i32) {
    %c0_i32 = arith.constant 0 : i32
    %c0_i32_0 = arith.constant 0 : i32
    return %c0_i32, %arg0 : i32, i32
  }
  func.func @transform_3(%arg0: i32) -> (i32, i32) {
    %c0_i32 = arith.constant 0 : i32
    %c0_i32_0 = arith.constant 0 : i32
    return %c0_i32, %arg0 : i32, i32
  }
  func.func @transform_4(%arg0: i32) -> (i32, i32, i32) {
    %c0_i32 = arith.constant 0 : i32
    %c0_i32_0 = arith.constant 0 : i32
    %c0_i32_1 = arith.constant 0 : i32
    return %arg0, %c0_i32, %c0_i32_0 : i32, i32, i32
  }
}

</mosaic_0001>

<llo_original>
// kernel: neural_recon_forward.1
$region0: #{neural_recon_forward.1}
  #allocation0 [shape = 'u32[]', space=smem, size = 0x4, offset = 0x4, fixed_abs, tag = 'smem constant byte address 0x4 - core index']
  #allocation1 [shape = 'u32[144,128]{1,0:T(1,128)}', space=vmem, size = 0x12000, scoped, tag = 'internal scratch']
  %s0 = inlined_call_operand.vmem [shape: f32[18,1], index: 0, kind: input, shape index: {}]
  %s1 = inlined_call_operand.vmem [shape: f32[18,1], index: 1, kind: input, shape index: {}]
  %s2 = inlined_call_operand.vmem [shape: f32[18,256], index: 2, kind: input, shape index: {}]
  %s3 = inlined_call_operand.vmem [shape: f32[18,256], index: 3, kind: output, shape index: {0}]
  %s4 = inlined_call_operand.vmem [shape: f32[1,18,1], index: 4, kind: output, shape index: {1}]
  %5 = xla_tuple %s3, %s4
  %s6 = sld [smem:[#allocation0]]
  $region30: #{neural_recon_forward.1} parent=0
    _
  %s8 = ssub.s32 1, %s6
  %s9 = scalar_select 0, %s8, %s6
  // Predicated region
  $region2: #{neural_recon_forward.1} parent=0 // pred_check
    _
  $region3: #{neural_recon_forward.1} parent=0 // pred_check_branch
    %11 = sbr.rel (0) target = $region5
  $region4: #{neural_recon_forward.1} parent=0 // pred_region
    _
  $region5: #{neural_recon_forward.1} parent=0 // pred_fallthru
    _
  // Predicated region
  $region6: #{neural_recon_forward.1} parent=0 // pred_check
    _
  $region7: #{neural_recon_forward.1} parent=0 // pred_check_branch
    %13 = sbr.rel (0) target = $region9
  $region8: #{neural_recon_forward.1} parent=0 // pred_region
    _
  $region9: #{neural_recon_forward.1} parent=0 // pred_fallthru
    _
  // Predicated region
  $region10: #{neural_recon_forward.1} parent=0 // pred_check
    _
  $region11: #{neural_recon_forward.1} parent=0 // pred_check_branch
    %15 = sbr.rel (0) target = $region13
  $region12: #{neural_recon_forward.1} parent=0 // pred_region
    _
  $region13: #{neural_recon_forward.1} parent=0 // pred_fallthru
    _
  %v16 = vld [vmem:[%s2] sm:$0xff]
  %v17 = vld [vmem:[%s2 + $0x8] sm:$0xff]
  %v18 = vld [vmem:[%s2 + $0x10] sm:$0xff]
  %v19 = vld [vmem:[%s2 + $0x18] sm:$0xff]
  %v20 = vld [vmem:[%s2 + $0x20] sm:$0x3]
  %v21 = vld [vmem:[%s2 + $0x28] sm:$0x3]
  %v22 = vld [vmem:[%s0] sm:$0xff]
  %v23 = vld [vmem:[%s0 + $0x8] sm:$0xff]
  %v24 = vld [vmem:[%s0 + $0x10] sm:$0x3]
  %26 = vset.pattern.permute.xlu0 0
  %27 = vperm.xlu0 %26, %v22
  %v28 = vpop.permute.xlu0 %27
  %31 = vset.pattern.permute.xlu0 0
  %32 = vperm.xlu0 %31, %v23
  %v33 = vpop.permute.xlu0 %32
  %36 = vset.pattern.permute.xlu0 0
  %37 = vperm.xlu0 %36, %v24
  %v38 = vpop.permute.xlu0 %37
  %v40 = vsub.f32 %v16, %v28
  %v41 = vsub.f32 %v17, %v28
  %v42 = vsub.f32 %v18, %v33
  %v43 = vsub.f32 %v19, %v33
  %v44 = vsub.f32 %v20, %v38
  %v45 = vsub.f32 %v21, %v38
  %v46 = vld [vmem:[%s1] sm:$0xff]
  %v47 = vld [vmem:[%s1 + $0x8] sm:$0xff]
  %v48 = vld [vmem:[%s1 + $0x10] sm:$0x3]
  %50 = vset.pattern.permute.xlu0 0
  %51 = vperm.xlu0 %50, %v46
  %v52 = vpop.permute.xlu0 %51
  %55 = vset.pattern.permute.xlu0 0
  %56 = vperm.xlu0 %55, %v47
  %v57 = vpop.permute.xlu0 %56
  %60 = vset.pattern.permute.xlu0 0
  %61 = vperm.xlu0 %60, %v48
  %v62 = vpop.permute.xlu0 %61
  %v64 = vmul.f32 %v40, %v52
  %v65 = vmul.f32 %v41, %v52
  %v66 = vmul.f32 %v42, %v57
  %v67 = vmul.f32 %v43, %v57
  %v68 = vmul.f32 %v44, %v62
  %v69 = vmul.f32 %v45, %v62
  %70 = vst [vmem:[%s3] sm:$0xff] %v64
  %71 = vst [vmem:[%s3 + $0x8] sm:$0xff] %v65
  %72 = vst [vmem:[%s3 + $0x10] sm:$0xff] %v66
  %73 = vst [vmem:[%s3 + $0x18] sm:$0xff] %v67
  %74 = vst [vmem:[%s3 + $0x20] sm:$0x3] %v68
  %75 = vst [vmem:[%s3 + $0x28] sm:$0x3] %v69
  %v76 = vand.u32 2147483647, %v64
  %v77 = vand.u32 2147483647, %v65
  %v78 = vand.u32 2147483647, %v66
  %v79 = vand.u32 2147483647, %v67
  %v80 = vand.u32 2147483647, %v68
  %v81 = vand.u32 2147483647, %v69
  %v82 = vadd.f32 %v76, %v77
  %83 = vadd.xlane.f32.xlu0 %v82
  %v84 = vpop.xlane.xlu0 %83
  %v85 = vadd.f32 %v78, %v79
  %86 = vadd.xlane.f32.xlu0 %v85
  %v87 = vpop.xlane.xlu0 %86
  %vm88 = vcmask 1041408
  %v89 = vsel %vm88, %v80, 0.0
  %v90 = vsel %vm88, %v81, 0.0
  %v91 = vadd.f32 %v89, %v90
  %92 = vadd.xlane.f32.xlu0 %v91
  %v93 = vpop.xlane.xlu0 %92
  %vm94 = vcmask 7168
  %95 = vst.msk [vmem:[%s4] sm:$0xff] %vm94, %v84
  %96 = vst.msk [vmem:[%s4 + $0x8] sm:$0xff] %vm94, %v87
  %vm97 = vcmask 1024
  %98 = vst.msk [vmem:[%s4 + $0x10] sm:$0x3] %vm97, %v93
  // Predicated region
  $region14: #{neural_recon_forward.1} parent=0 // pred_check
    _
  $region15: #{neural_recon_forward.1} parent=0 // pred_check_branch
    %100 = sbr.rel (0) target = $region17
  $region16: #{neural_recon_forward.1} parent=0 // pred_region
    _
  $region17: #{neural_recon_forward.1} parent=0 // pred_fallthru
    _
  // Predicated region
  $region18: #{neural_recon_forward.1} parent=0 // pred_check
    _
  $region19: #{neural_recon_forward.1} parent=0 // pred_check_branch
    %102 = sbr.rel (0) target = $region21
  $region20: #{neural_recon_forward.1} parent=0 // pred_region
    _
  $region21: #{neural_recon_forward.1} parent=0 // pred_fallthru
    _
  // Predicated region
  $region22: #{neural_recon_forward.1} parent=0 // pred_check
    _
  $region23: #{neural_recon_forward.1} parent=0 // pred_check_branch
    %104 = sbr.rel (0) target = $region25
  $region24: #{neural_recon_forward.1} parent=0 // pred_region
    _
  $region25: #{neural_recon_forward.1} parent=0 // pred_fallthru
    _
  // Predicated region
  $region26: #{neural_recon_forward.1} parent=0 // pred_check
    _
  $region27: #{neural_recon_forward.1} parent=0 // pred_check_branch
    %106 = sbr.rel (0) target = $region29
  $region28: #{neural_recon_forward.1} parent=0 // pred_region
    _
  $region29: #{neural_recon_forward.1} parent=0 // pred_fallthru
    _

</llo_original>
